<compile_context>
chip_gen: v5e
topology: v5e:2x2
jax: 0.10.0
libtpu: 0.0.40
codegen_flags: <defaults>
</compile_context>

<pallas_src>
import functools
import math

import jax
import jax.numpy as jnp
from jax.experimental import pallas as pl
from jax.experimental.pallas import tpu as pltpu

_LANES = 128
_TINY_FALLBACK_BYTES = 16 << 10  # ragged inputs below this use a plain XLA divide


def _sublane_multiple(dtype) -> int:
    # f32 -> 8, bf16 -> 16, int8/fp8 -> 32 (sublane packing)
    itemsize = jnp.dtype(dtype).itemsize
    return max(8, 32 // max(itemsize, 1))


def _chip_config():
    """Per-generation tiling knobs."""
    kind = ""
    try:
        kind = jax.devices()[0].device_kind.lower()
    except Exception:
        pass
    if "v7" in kind or "7x" in kind:
        # 2 TensorCores, 3.2 TB/s HBM, 32 MiB default scoped VMEM of 64 MiB physical.
        # 4 MiB blocks (in + out, double-buffered = 16 MiB) amortize the ~0.35 us
        # per-step overhead; target >= 4 even grid steps so each core pipelines.
        return {"max_block_bytes": 4 << 20, "split_threshold": 2 << 20,
                "min_steps": 4, "even_steps": True, "native_low_precision": True}
    if "v6" in kind:
        # Single TC, 32 MiB default scoped VMEM: 4 MiB blocks, split only when needed.
        return {"max_block_bytes": 4 << 20, "split_threshold": 8 << 20,
                "min_steps": 2, "even_steps": False, "native_low_precision": True}
    # v5e / unknown: 0.82 TB/s means a 2 MiB block already hides step overhead,
    # and the 16 MiB default scoped VMEM leaves no room for bigger tiles.
    return {"max_block_bytes": 2 << 20, "split_threshold": 8 << 20,
            "min_steps": 2, "even_steps": False, "native_low_precision": False}


def _temperature_kernel(t_ref, x_ref, o_ref, *, promote_f32):
    # t_ref: (1,) f32 temperature in SMEM; x_ref / o_ref: 2-D tiles in VMEM.
    inv = 1.0 / t_ref[0]                      # one exact scalar divide per grid step
    x = x_ref[...]
    if promote_f32:
        y = x.astype(jnp.float32) * inv       # v5e: no bf16 VALU
    else:
        y = x * inv.astype(x.dtype)           # native-precision VALU multiply
    o_ref[...] = y.astype(o_ref.dtype)


def _choose_block_rows(rows, cols, itemsize, sub, cfg):
    """Biggest row-tile that fits the per-chip VMEM budget, split into enough
    grid steps to respect VMEM and (on v7x) feed both TensorCores."""
    row_bytes = cols * itemsize
    total_bytes = rows * row_bytes
    max_rows = max(sub, (cfg["max_block_bytes"] // row_bytes) // sub * sub)

    if rows <= sub:
        return rows
    if total_bytes <= cfg["split_threshold"] and rows <= max_rows:
        return rows                            # single full-extent block, grid=(1,)

    steps = max(cfg["min_steps"], pl.cdiv(rows, max_rows))
    if cfg["even_steps"] and steps % 2:
        steps += 1                             # even step count -> both TCs finish together
    block_rows = pl.cdiv(pl.cdiv(rows, steps), sub) * sub
    block_rows = max(sub, min(block_rows, max_rows))
    if block_rows >= rows:
        return rows
    return block_rows


def _launch(x2d, t_smem, block_rows, promote_f32, donate, flops, bytes_accessed):
    rows, cols = x2d.shape
    grid_steps = pl.cdiv(rows, block_rows)
    kernel = functools.partial(_temperature_kernel, promote_f32=promote_f32)
    return pl.pallas_call(
        kernel,
        out_shape=jax.ShapeDtypeStruct((rows, cols), x2d.dtype),
        grid=(grid_steps,),
        in_specs=[
            # scalar temperature lives in SMEM, same block every grid step
            pl.BlockSpec(memory_space=pltpu.MemorySpace.SMEM),
            pl.BlockSpec((block_rows, cols), lambda i: (i, 0)),
        ],
        out_specs=pl.BlockSpec((block_rows, cols), lambda i: (i, 0)),
        compiler_params=pltpu.CompilerParams(dimension_semantics=("parallel",)),
        cost_estimate=pl.CostEstimate(
            flops=flops, transcendentals=0, bytes_accessed=bytes_accessed),
        input_output_aliases=({1: 0} if donate else {}),
    )(t_smem, x2d)


def temperature_scale(logits: jax.Array, temperature: jax.Array, *, donate: bool = False):
    """Pallas equivalent of Temperature.temperature_scale: logits / temperature.

    logits:      (N, C) (any shape works — the op is elementwise)
    temperature: (1,)   scalar parameter
    donate:      alias the logits buffer to the output (only useful when the
                 caller donates logits under jit).
    """
    orig_shape = logits.shape
    dtype = logits.dtype

    def _xla_fallback():
        return (logits / temperature.astype(jnp.float32)[0]).astype(dtype)

    # TODO(synk): integer logits would need true division semantics; hand to XLA.
    if not jnp.issubdtype(dtype, jnp.floating):
        return logits / temperature.astype(jnp.float32)[0]

    total = math.prod(orig_shape) if orig_shape else 1
    if total == 0 or logits.ndim == 0:
        return _xla_fallback()

    itemsize = jnp.dtype(dtype).itemsize
    total_bytes = total * itemsize
    cfg = _chip_config()
    sub = _sublane_multiple(dtype)
    promote_f32 = (dtype != jnp.float32) and not cfg["native_low_precision"]

    t_smem = temperature.astype(jnp.float32).reshape(1)
    flops = total
    bytes_accessed = 2 * total_bytes

    if total % _LANES == 0:
        # Lane-dense path: every store is a full, unmasked vreg store.
        rows = total // _LANES
        x2d = logits.reshape(rows, _LANES)
        block_rows = _choose_block_rows(rows, _LANES, itemsize, sub, cfg)
        out2d = _launch(x2d, t_smem, block_rows, promote_f32, donate,
                        flops, bytes_accessed)
        return out2d.reshape(orig_shape)

    # Ragged path: no pad/slice (each would be a full extra HBM pass). Grid the
    # original rows directly with a full-extent last dim; only the tail vreg of
    # each row uses masked lane stores.
    if total_bytes < _TINY_FALLBACK_BYTES:
        return _xla_fallback()

    x2d = logits.reshape(1, total) if logits.ndim == 1 else logits.reshape(-1, orig_shape[-1])
    rows, cols = x2d.shape
    if cols * itemsize * sub > cfg["max_block_bytes"]:
        # Cannot tile a non-128-multiple last dim; let XLA handle this corner case.
        return _xla_fallback()
    block_rows = _choose_block_rows(rows, cols, itemsize, sub, cfg)
    out2d = _launch(x2d, t_smem, block_rows, promote_f32, donate,
                    flops, bytes_accessed)
    return out2d.reshape(orig_shape)


if __name__ == "__main__":
    key = jax.random.PRNGKey(0)
    k1, k2, k3, k4 = jax.random.split(key, 4)

    # Small shape implied by the module: batch of logits (N samples, C classes).
    N, C = 16, 32
    logits = jax.random.normal(k1, (N, C), dtype=jnp.float32)
    temperature = jnp.ones((1,), dtype=jnp.float32)  # nn.Parameter(torch.ones(1))

    out = jax.block_until_ready(temperature_scale(logits, temperature))
    assert out.shape == logits.shape
    assert jnp.allclose(out, logits, atol=1e-6), "mismatch vs reference (T=1.0)"

    t2 = jnp.asarray([1.7], dtype=jnp.float32)
    out2 = jax.block_until_ready(temperature_scale(logits, t2))
    assert jnp.allclose(out2, logits / 1.7, atol=1e-5), "mismatch (T=1.7)"

    # Ragged last dim, big enough for the in-kernel ragged (full-extent C) path.
    logits_r = jax.random.normal(k2, (64, 65), dtype=jnp.float32)
    out3 = jax.block_until_ready(temperature_scale(logits_r, t2))
    assert jnp.allclose(out3, logits_r / 1.7, atol=1e-5), "mismatch (ragged)"

    # Tiny ragged input -> plain XLA fallback path.
    logits_t = jax.random.normal(k3, (7, 33), dtype=jnp.float32)
    out4 = jax.block_until_ready(temperature_scale(logits_t, t2))
    assert jnp.allclose(out4, logits_t / 1.7, atol=1e-5), "mismatch (tiny ragged)"

    # Larger lane-dense input exercising the multi-step / split path.
    logits_b = jax.random.normal(k4, (4096, 512), dtype=jnp.float32)
    out5 = jax.block_until_ready(temperature_scale(logits_b, t2))
    assert jnp.allclose(out5, logits_b / 1.7, atol=1e-5), "mismatch (big)"

    # bf16 path (native multiply on v6e/v7x, f32-promoted on v5e).
    logits_bf = logits.astype(jnp.bfloat16)
    out6 = jax.block_until_ready(temperature_scale(logits_bf, t2))
    assert jnp.allclose(out6.astype(jnp.float32),
                        logits_bf.astype(jnp.float32) / 1.7, atol=3e-2), "mismatch (bf16)"

    print("KERNEL_OK")
</pallas_src>

<mosaic_0001>
module attributes {stable_mosaic.version = 11 : i64} {
  func.func @_temperature_kernel(%arg0: i32, %arg1: memref<1xf32, #tpu.memory_space<smem>>, %arg2: memref<4x128xf32, #tpu.memory_space<vmem>>, %arg3: memref<4x128xf32, #tpu.memory_space<vmem>>) attributes {dimension_semantics = [#tpu.dimension_semantics<parallel>], iteration_bounds = array<i64: 1>, scalar_prefetch = 0 : i64, scratch_operands = 0 : i64, tpu.core_type = #tpu.core_type<tc>, window_params = [{transform_indices = @transform_0, window_bounds = array<i64: 1>}, {transform_indices = @transform_1, window_bounds = array<i64: 4, 128>}, {transform_indices = @transform_2, window_bounds = array<i64: 4, 128>}]} {
    %c0 = arith.constant 0 : index
    %0 = memref.load %arg1[%c0] : memref<1xf32, #tpu.memory_space<smem>>
    %cst = arith.constant 1.000000e+00 : f32
    %1 = arith.divf %cst, %0 : f32
    %c0_0 = arith.constant 0 : index
    %c0_1 = arith.constant 0 : index
    %2 = vector.load %arg2[%c0_0, %c0_1] : memref<4x128xf32, #tpu.memory_space<vmem>>, vector<4x128xf32>
    %3 = vector.broadcast %1 : f32 to vector<4x128xf32>
    %4 = arith.mulf %2, %3 : vector<4x128xf32>
    %c0_2 = arith.constant 0 : index
    %c0_3 = arith.constant 0 : index
    %5 = vector.load %arg3[%c0_2, %c0_3] : memref<4x128xf32, #tpu.memory_space<vmem>>, vector<4x128xf32>
    tpu.vector_store %arg3[%c0_2, %c0_3], %4 {strides = array<i32>} : memref<4x128xf32, #tpu.memory_space<vmem>>, vector<4x128xf32>,
    return
  }
  func.func @transform_0(%arg0: i32) -> i32 {
    %c0_i32 = arith.constant 0 : i32
    %c0_i32_0 = arith.constant 0 : i32
    return %c0_i32 : i32
  }
  func.func @transform_1(%arg0: i32) -> (i32, i32) {
    %c0_i32 = arith.constant 0 : i32
    %c0_i32_0 = arith.constant 0 : i32
    return %arg0, %c0_i32 : i32, i32
  }
  func.func @transform_2(%arg0: i32) -> (i32, i32) {
    %c0_i32 = arith.constant 0 : i32
    %c0_i32_0 = arith.constant 0 : i32
    return %arg0, %c0_i32 : i32, i32
  }
}

</mosaic_0001>

<llo_original>
// kernel: tpu_custom_call.1
$region0: #{tpu_custom_call.1}
  #allocation0 [shape = 'u32[]', space=smem, size = 0x4, offset = 0x4, fixed_abs, tag = 'smem constant byte address 0x4 - core index']
  #allocation1 [shape = 'u32[72,128]{1,0:T(1,128)}', space=vmem, size = 0x9000, scoped, tag = 'internal scratch']
  #allocation2 [shape = 'f32[1]{0:T(128)S(6)}', space=smem, size = 0x200, scoped, tag = 'scoped memory for tpu_custom_call.1']
  %s0 = inlined_call_operand.<no memory space> [shape: f32[1], index: 0, kind: input, shape index: {}]
  %s1 = inlined_call_operand.hbm [shape: f32[4,128], index: 1, kind: input, shape index: {}]
  %s2 = inlined_call_operand.hbm [shape: f32[4,128], index: 2, kind: output, shape index: {}]
  %s3 = sld [smem:[#allocation0]]
  $region22: #{tpu_custom_call.1} parent=0
    _
  %s5 = ssub.s32 1, %s3
  %s6 = scalar_select 0, %s5, %s3
  %7 = sst [smem:[#allocation2]] %s0
  $region1: #{tpu_custom_call.1} parent=0
    #allocation3 [shape = 'u8[2048]{0}', space=vmem, size = 0x800, scoped, tag = 'input window, operand 1, single buffered']
    #allocation4 [shape = 's32[1]{0}', space=sflag, size = 0x4, scoped, tag = 'scoped memory for tpu_custom_call.1']
    #allocation5 [shape = 's32[1]{0}', space=sflag, size = 0x4, scoped, tag = 'scoped memory for tpu_custom_call.1']
    #allocation6 [shape = 'u8[2048]{0}', space=vmem, size = 0x800, scoped, tag = 'output window, operand 0, single buffered']
    %8 = vsyncpa [#allocation4], 0
    %9 = vsyncpa [#allocation5], 0
    // Predicated region
    $region2: #{tpu_custom_call.1} parent=1 // pred_check
      _
    $region3: #{tpu_custom_call.1} parent=1 // pred_check_branch
      %11 = sbr.rel (0) target = $region5
    $region4: #{tpu_custom_call.1} parent=1 // pred_region
      _
    $region5: #{tpu_custom_call.1} parent=1 // pred_fallthru
      _
    // Predicated region
    $region6: #{tpu_custom_call.1} parent=1 // pred_check
      _
    $region7: #{tpu_custom_call.1} parent=1 // pred_check_branch
      %13 = sbr.rel (0) target = $region9
    $region8: #{tpu_custom_call.1} parent=1 // pred_region
      %15 = vsyncadd [#allocation4], 0
      %s17 = sshll.u32 %s1, 4
      %s18 = int_to_ptr.hbm [resolvable:$true] %s17
      %s19 = sshll.u32 [#allocation3], 4
      %s20 = int_to_ptr.vmem [resolvable:$true] %s19
      %22 = dma.hbm_to_vmem [thread:$0]  %s18, 64, %s20, [#allocation4]
    $region9: #{tpu_custom_call.1} parent=1 // pred_fallthru
      _
    // Predicated region
    $region10: #{tpu_custom_call.1} parent=1 // pred_check
      _
    $region11: #{tpu_custom_call.1} parent=1 // pred_check_branch
      %24 = sbr.rel (0) target = $region13
    $region12: #{tpu_custom_call.1} parent=1 // pred_region
      %26 = dma.done [#allocation4], 64
    $region13: #{tpu_custom_call.1} parent=1 // pred_fallthru
      _
    %s27 = sld [smem:[#allocation2]]
    %v28 = vstv %s27
    %v29 = vrcp.pop %v28
    %v30 = vmul.f32 %v28, %v29
    %v31 = vsub.f32 1.0, %v30
    %v32 = vmul.f32 %v29, %v31
    %v33 = vadd.f32 %v29, %v32
    %vm34 = vweird.f32 %v28
    %vm35 = vweird.f32 %v29
    %vm36 = vmor %vm34, %vm35
    %v37 = vsel %vm36, %v29, %v33
    %v38 = vand.u32 2147483647, %v28
    %vm39 = vcmp.eq.f32.partialorder %v38, 8.507059e+37
    %v40 = vand.u32 %v28, 2147483648
    %v41 = vor.u32 1.1754944e-38, %v40
    %v42 = vsel %vm39, %v41, %v37
    %s43 = vtos %v42
    %v44 = vld [vmem:[#allocation3] sm:$0xf]
    %v45 = vstv %s43
    %v46 = vmul.f32 %v44, %v45
    %47 = vst [vmem:[#allocation6] sm:$0xf] %v46
    // Predicated region
    $region14: #{tpu_custom_call.1} parent=1 // pred_check
      _
    $region15: #{tpu_custom_call.1} parent=1 // pred_check_branch
      %49 = sbr.rel (0) target = $region17
    $region16: #{tpu_custom_call.1} parent=1 // pred_region
      %51 = vsyncadd [#allocation5], 0
      %s53 = sshll.u32 [#allocation6], 4
      %s54 = int_to_ptr.vmem [resolvable:$true] %s53
      %s55 = sshll.u32 %s2, 4
      %s56 = int_to_ptr.hbm [resolvable:$true] %s55
      %58 = dma.vmem_to_hbm [thread:$0]  %s54, 64, %s56, [#allocation5]
    $region17: #{tpu_custom_call.1} parent=1 // pred_fallthru
      _
    // Predicated region
    $region18: #{tpu_custom_call.1} parent=1 // pred_check
      _
    $region19: #{tpu_custom_call.1} parent=1 // pred_check_branch
      %60 = sbr.rel (0) target = $region21
    $region20: #{tpu_custom_call.1} parent=1 // pred_region
      %62 = dma.done [#allocation5], 64
    $region21: #{tpu_custom_call.1} parent=1 // pred_fallthru
      _
    %63 = vsyncpa [#allocation4], 1
    %64 = vsyncpa [#allocation5], 1

</llo_original>
